<compile_context>
chip_gen: v5e
topology: v5e:2x2
jax: 0.10.0
libtpu: 0.0.40
codegen_flags: <defaults>
</compile_context>

<pallas_src>
import jax
import jax.numpy as jnp
from jax.experimental import pallas as pl
from jax.experimental.pallas import tpu as pltpu


def _round_up(a, b):
    return (a + b - 1) // b * b


def _vmem_capacity_bytes():
    try:
        info = pltpu.get_tpu_info()
        cap = int(getattr(info, "vmem_capacity_bytes", 0))
        if cap > 0:
            return cap
    except Exception:
        pass
    return 64 * 1024 * 1024          # conservative fallback: v7x per-TensorCore VMEM


def _vmem_estimate(TH, W8, Wo, C, Cout, opsz):
    """Rough per-step VMEM footprint in bytes (window, operands, acc, out, weights)."""
    K = 4 * C
    M = TH * W8
    RW = (TH + 1) * W8 + 8
    z2 = 2 * RW * K * opsz           # double-buffered input window
    opnd = 2 * M * K * opsz          # live sliced matmul operands (worst case)
    acc = M * Cout * 4               # f32 accumulator
    outb = 2 * TH * Wo * Cout * 4    # double-buffered output block
    wgt = 2 * 4 * K * Cout * opsz    # weights
    return z2 + opnd + acc + outb + wgt + (2 << 20)


def _pick_row_tile(N, Ho, W8, Wo, C, Cout, opsz, budget):
    cands = [t for t in range(1, Ho + 1) if Ho % t == 0]
    if N == 1 and Ho >= 2:
        # v7x has 2 TensorCores: a single-image batch must still expose >=2 shards.
        cands = [t for t in cands if Ho // t >= 2]
    best = None
    for t in cands:                  # ascending -> keep the largest tile that fits
        if _vmem_estimate(t, W8, Wo, C, Cout, opsz) <= budget:
            best = t
    if best is None:
        # TODO(synk): tile Cout instead of failing once the weights no longer fit.
        raise ValueError("DownSample: even a 1-row tile does not fit the VMEM budget; "
                         "output-channel tiling is required for this size.")
    return best


def _accum_taps(src, w_ref, b_ref, out_ref, TH, W8, Wo):
    """4-tap (2x2 stride-1) conv over the flattened space-to-depth window.

    src:  ref view of shape (>= (TH+1)*W8 + 1, 4*Cin)
    w_ref: (4, 4*Cin, Cout); b_ref: (1, Cout) f32; out_ref: (TH, Wo, Cout)
    """
    M = TH * W8
    Cout = out_ref.shape[-1]
    # Bias folded into the accumulator init (saves one full-tile VPU add pass).
    acc = jnp.broadcast_to(b_ref[...].astype(jnp.float32), (M, Cout))
    # Tap t = by*2 + bx lives at flat row offset by*W8 + bx: four unit-stride slices
    # of one buffer -> four MXU matmuls accumulated in f32 (no per-tap relayouts).
    for i, off in enumerate((0, 1, W8, W8 + 1)):
        acc = acc + jnp.dot(src[pl.ds(off, M)], w_ref[i],
                            preferred_element_type=jnp.float32)
    out_ref[...] = acc.reshape(TH, W8, Cout)[:, :Wo, :].astype(out_ref.dtype)


def downsample_pallas(x_nchw, w, b, *, row_tile=None, out_layout="NCHW",
                      operand_dtype=jnp.bfloat16):
    """x_nchw: (N, C, H, W) f32; w: (Cout, C, 3, 3); b: (Cout,).

    DownSample forward (pad bottom/right by 1, then 3x3 stride-2 VALID conv).
    Returns (N, Cout, H//2, W//2) for out_layout="NCHW", NHWC otherwise.
    """
    N, C, H, W = x_nchw.shape
    Cout = w.shape[0]
    Ho, Wo = H // 2, W // 2                 # == floor(((H+1) - 3) / 2) + 1
    K = 4 * C
    W8 = _round_up(Wo + 1, 8)               # sublane-aligned s2d width (+1 halo col)
    opsz = jnp.dtype(operand_dtype).itemsize

    # -------- wrapper-side layout plumbing (one fused XLA pass over x) ------------
    # NHWC + zero-pad bottom/right so an (Ho+2, W8) grid of 2x2 blocks exists.  The
    # padding beyond PyTorch's single pad row/col only ever meets the zero-padded
    # weight taps or discarded (w >= Wo) output columns, so semantics are unchanged.
    x = jnp.transpose(x_nchw, (0, 2, 3, 1))
    Hp, Wp = 2 * (Ho + 2), 2 * W8
    x_pad = jnp.pad(x, ((0, 0), (0, Hp - H), (0, Wp - W), (0, 0)))
    # space-to-depth (2x2 block -> channels, channel = (py*2+px)*C + c), then flatten
    # the (row, col) grid row-major so every conv tap is a unit-stride row offset.
    z = x_pad.reshape(N, Ho + 2, 2, W8, 2, C)
    z = jnp.transpose(z, (0, 1, 3, 2, 4, 5))
    z = z.reshape(N, (Ho + 2) * W8, K).astype(operand_dtype)

    # weights (Cout, Cin, 3, 3) -> zero-pad to 4x4 -> 4 taps of (4*Cin, Cout)
    wpad = jnp.pad(w, ((0, 0), (0, 0), (0, 1), (0, 1)))
    wk = wpad.reshape(Cout, C, 2, 2, 2, 2)
    wk = jnp.transpose(wk, (2, 4, 3, 5, 1, 0)).reshape(4, K, Cout).astype(operand_dtype)
    bk = b.reshape(1, Cout).astype(jnp.float32)

    # -------- generation-aware VMEM budget drives both tile pick and limit --------
    cap = _vmem_capacity_bytes()
    budget = int(0.70 * cap)
    vmem_limit = min(int(0.85 * cap), 112 * 1024 * 1024)
    if row_tile is None:
        TH = _pick_row_tile(N, Ho, W8, Wo, C, Cout, opsz, budget)
    else:
        TH = int(row_tile)
        assert Ho % TH == 0, "row_tile must divide the output height"
        if _vmem_estimate(TH, W8, Wo, C, Cout, opsz) > vmem_limit:
            raise ValueError("row_tile too large for this chip's VMEM")
    n_tiles = Ho // TH

    out_shape = jax.ShapeDtypeStruct((N, Ho, Wo, Cout), jnp.float32)

    if n_tiles == 1:
        # ---------- path A: whole image fits -> plain BlockSpec pipelining --------
        RZ = (Ho + 2) * W8

        def kernel_a(z_ref, w_ref, b_ref, out_ref):
            _accum_taps(z_ref, w_ref, b_ref, out_ref, Ho, W8, Wo)

        out_nhwc = pl.pallas_call(
            kernel_a,
            out_shape=out_shape,
            grid=(N,),
            in_specs=[
                pl.BlockSpec((None, RZ, K), lambda n: (n, 0, 0)),
                pl.BlockSpec((4, K, Cout), lambda n: (0, 0, 0)),
                pl.BlockSpec((1, Cout), lambda n: (0, 0)),
            ],
            out_specs=pl.BlockSpec((None, Ho, Wo, Cout), lambda n: (n, 0, 0, 0)),
            compiler_params=pltpu.CompilerParams(
                dimension_semantics=("parallel",),
                vmem_limit_bytes=vmem_limit),
        )(z, wk, bk)
    else:
        # ---------- path B: row-tiled, manual double-buffered window DMA ----------
        # The (TH+1)-row halo window overlaps between tiles, so z stays in HBM
        # (pl.ANY); each window is DMA'd into a 2-slot VMEM scratch and the next
        # tile's window is prefetched while the current one is consumed.
        P = 2 if (N == 1 and n_tiles % 2 == 0) else 1    # >=2 parallel shards on v7x
        Q = n_tiles // P
        RW = (TH + 1) * W8 + 8        # window rows (+spare rows covering the last tap)
        STEP = TH * W8

        def kernel_b(z_hbm, w_ref, b_ref, out_ref, zbuf, sem):
            o = pl.program_id(0)
            q = pl.program_id(1)
            n = o // P
            p = o % P
            slot = q % 2

            def start(tile_idx, s):
                pltpu.make_async_copy(
                    z_hbm.at[n, pl.ds(tile_idx * STEP, RW)],
                    zbuf.at[s], sem.at[s]).start()

            @pl.when(q == 0)          # first window of this shard (not overlapped)
            def _():
                start(p * Q, 0)

            @pl.when(q + 1 < Q)       # prefetch the next window into the free slot
            def _():
                start(p * Q + q + 1, 1 - slot)

            pltpu.make_async_copy(z_hbm.at[n, pl.ds(0, RW)],
                                  zbuf.at[slot], sem.at[slot]).wait()
            _accum_taps(zbuf.at[slot], w_ref, b_ref, out_ref, TH, W8, Wo)

        out_nhwc = pl.pallas_call(
            kernel_b,
            out_shape=out_shape,
            grid=(N * P, Q),
            in_specs=[
                pl.BlockSpec(memory_space=pl.ANY),
                pl.BlockSpec((4, K, Cout), lambda o, q: (0, 0, 0)),
                pl.BlockSpec((1, Cout), lambda o, q: (0, 0)),
            ],
            out_specs=pl.BlockSpec(
                (None, TH, Wo, Cout),
                lambda o, q: (o // P, (o % P) * Q + q, 0, 0)),
            scratch_shapes=[
                pltpu.VMEM((2, RW, K), operand_dtype),
                pltpu.SemaphoreType.DMA((2,)),
            ],
            compiler_params=pltpu.CompilerParams(
                dimension_semantics=("parallel", "arbitrary"),
                vmem_limit_bytes=vmem_limit),
        )(z, wk, bk)

    if out_layout == "NHWC":
        return out_nhwc
    return jnp.transpose(out_nhwc, (0, 3, 1, 2))


# ---------------- pure-JAX reference (mirrors the PyTorch module) ----------------
def ref_forward(x, w, b):
    xp = jnp.pad(x, ((0, 0), (0, 0), (0, 1), (0, 1)))       # F.pad(x, (0,1,0,1))
    o = jax.lax.conv_general_dilated(
        xp, w, window_strides=(2, 2), padding="VALID",
        dimension_numbers=("NCHW", "OIHW", "NCHW"),
        precision=jax.lax.Precision.HIGHEST)
    return o + b.reshape(1, -1, 1, 1)


if __name__ == "__main__":
    key = jax.random.PRNGKey(0)
    ok = True
    cases = [
        # (N, C, H, W, row_tile, out_layout)
        (2, 4, 16, 16, None, "NCHW"),    # whole-image path (A)
        (2, 32, 17, 17, None, "NCHW"),   # odd spatial dims (extra pad row unused)
        (1, 32, 32, 32, None, "NCHW"),   # N==1 -> forced >=2 row tiles (path B, P=2)
        (2, 16, 24, 40, 4, "NHWC"),      # multi-tile prefetch path (B, Q=3), NHWC out
    ]
    for i, (N, C, H, W, rt, layout) in enumerate(cases):
        kx, kw, kb = jax.random.split(jax.random.fold_in(key, i), 3)
        x = jax.random.normal(kx, (N, C, H, W), jnp.float32)
        w = 0.1 * jax.random.normal(kw, (C, C, 3, 3), jnp.float32)
        b = 0.1 * jax.random.normal(kb, (C,), jnp.float32)

        out = jax.block_until_ready(
            downsample_pallas(x, w, b, row_tile=rt, out_layout=layout))

        ref = ref_forward(x, w, b)                           # f32 module semantics
        ref_bf = ref_forward(                                # same bf16 operand rounding
            x.astype(jnp.bfloat16).astype(jnp.float32),
            w.astype(jnp.bfloat16).astype(jnp.float32), b)
        if layout == "NHWC":
            ref = jnp.transpose(ref, (0, 2, 3, 1))
            ref_bf = jnp.transpose(ref_bf, (0, 2, 3, 1))
        ref = jax.block_until_ready(ref)
        ref_bf = jax.block_until_ready(ref_bf)

        err_bf = float(jnp.max(jnp.abs(out - ref_bf)))       # vs bf16-rounded operands
        err_f32 = float(jnp.max(jnp.abs(out - ref)))         # vs full-f32 module
        if out.shape != ref.shape or err_bf > 2e-3 or err_f32 > 1e-1:
            ok = False
            print(f"MISMATCH case={i} out={out.shape} ref={ref.shape} "
                  f"err_vs_bf16_ref={err_bf:.3e} err_vs_f32_ref={err_f32:.3e}")

    if ok:
        print("KERNEL_OK")
</pallas_src>

<mosaic_0001>
module attributes {stable_mosaic.version = 11 : i64} {
  func.func @kernel_a(%arg0: i32, %arg1: memref<1x160x16xbf16, #tpu.memory_space<vmem>>, %arg2: memref<4x16x4xbf16, #tpu.memory_space<vmem>>, %arg3: memref<1x4xf32, #tpu.memory_space<vmem>>, %arg4: memref<1x8x8x4xf32, #tpu.memory_space<vmem>>) attributes {dimension_semantics = [#tpu.dimension_semantics<parallel>], iteration_bounds = array<i64: 2>, scalar_prefetch = 0 : i64, scratch_operands = 0 : i64, tpu.core_type = #tpu.core_type<tc>, window_params = [{transform_indices = @transform_0, window_bounds = array<i64: 1, 160, 16>}, {pipeline_mode = #tpu.pipeline_mode<synchronous>, transform_indices = @transform_1, window_bounds = array<i64: 4, 16, 4>}, {pipeline_mode = #tpu.pipeline_mode<synchronous>, transform_indices = @transform_2, window_bounds = array<i64: 1, 4>}, {transform_indices = @transform_3, window_bounds = array<i64: 1, 8, 8, 4>}]} {
    %c0 = arith.constant 0 : index
    %c0_0 = arith.constant 0 : index
    %0 = vector.load %arg3[%c0, %c0_0] : memref<1x4xf32, #tpu.memory_space<vmem>>, vector<1x4xf32>
    %1 = vector.shape_cast %0 : vector<1x4xf32> to vector<1x4xf32>
    %2 = vector.broadcast %1 : vector<1x4xf32> to vector<128x4xf32>
    %c0_1 = arith.constant 0 : index
    %c0_2 = arith.constant 0 : index
    %c0_3 = arith.constant 0 : index
    %3 = vector.load %arg1[%c0_1, %c0_2, %c0_3] : memref<1x160x16xbf16, #tpu.memory_space<vmem>>, vector<1x128x16xbf16>
    %4 = vector.shape_cast %3 : vector<1x128x16xbf16> to vector<128x16xbf16>
    %c0_4 = arith.constant 0 : index
    %c0_5 = arith.constant 0 : index
    %c0_6 = arith.constant 0 : index
    %5 = vector.load %arg2[%c0_4, %c0_5, %c0_6] : memref<4x16x4xbf16, #tpu.memory_space<vmem>>, vector<1x16x4xbf16>
    %6 = vector.shape_cast %5 : vector<1x16x4xbf16> to vector<16x4xbf16>
    %cst = arith.constant dense<0.000000e+00> : vector<128x4xf32>
    %7 = tpu.matmul %4, %6, %cst {dimension_numbers = #tpu.dot_dimension_numbers<[1], [0], [0], [1], [0, 0, 1, 1], [], []>} : vector<128x16xbf16>, vector<16x4xbf16>, vector<128x4xf32> -> vector<128x4xf32>
    %8 = arith.addf %2, %7 : vector<128x4xf32>
    %c0_7 = arith.constant 0 : index
    %c1 = arith.constant 1 : index
    %c0_8 = arith.constant 0 : index
    %9 = vector.load %arg1[%c0_7, %c1, %c0_8] : memref<1x160x16xbf16, #tpu.memory_space<vmem>>, vector<1x128x16xbf16>
    %10 = vector.shape_cast %9 : vector<1x128x16xbf16> to vector<128x16xbf16>
    %c1_9 = arith.constant 1 : index
    %c0_10 = arith.constant 0 : index
    %c0_11 = arith.constant 0 : index
    %11 = vector.load %arg2[%c1_9, %c0_10, %c0_11] : memref<4x16x4xbf16, #tpu.memory_space<vmem>>, vector<1x16x4xbf16>
    %12 = vector.shape_cast %11 : vector<1x16x4xbf16> to vector<16x4xbf16>
    %cst_12 = arith.constant dense<0.000000e+00> : vector<128x4xf32>
    %13 = tpu.matmul %10, %12, %cst_12 {dimension_numbers = #tpu.dot_dimension_numbers<[1], [0], [0], [1], [0, 0, 1, 1], [], []>} : vector<128x16xbf16>, vector<16x4xbf16>, vector<128x4xf32> -> vector<128x4xf32>
    %14 = arith.addf %8, %13 : vector<128x4xf32>
    %c0_13 = arith.constant 0 : index
    %c16 = arith.constant 16 : index
    %c0_14 = arith.constant 0 : index
    %15 = vector.load %arg1[%c0_13, %c16, %c0_14] : memref<1x160x16xbf16, #tpu.memory_space<vmem>>, vector<1x128x16xbf16>
    %16 = vector.shape_cast %15 : vector<1x128x16xbf16> to vector<128x16xbf16>
    %c2 = arith.constant 2 : index
    %c0_15 = arith.constant 0 : index
    %c0_16 = arith.constant 0 : index
    %17 = vector.load %arg2[%c2, %c0_15, %c0_16] : memref<4x16x4xbf16, #tpu.memory_space<vmem>>, vector<1x16x4xbf16>
    %18 = vector.shape_cast %17 : vector<1x16x4xbf16> to vector<16x4xbf16>
    %cst_17 = arith.constant dense<0.000000e+00> : vector<128x4xf32>
    %19 = tpu.matmul %16, %18, %cst_17 {dimension_numbers = #tpu.dot_dimension_numbers<[1], [0], [0], [1], [0, 0, 1, 1], [], []>} : vector<128x16xbf16>, vector<16x4xbf16>, vector<128x4xf32> -> vector<128x4xf32>
    %20 = arith.addf %14, %19 : vector<128x4xf32>
    %c0_18 = arith.constant 0 : index
    %c17 = arith.constant 17 : index
    %c0_19 = arith.constant 0 : index
    %21 = vector.load %arg1[%c0_18, %c17, %c0_19] : memref<1x160x16xbf16, #tpu.memory_space<vmem>>, vector<1x128x16xbf16>
    %22 = vector.shape_cast %21 : vector<1x128x16xbf16> to vector<128x16xbf16>
    %c3 = arith.constant 3 : index
    %c0_20 = arith.constant 0 : index
    %c0_21 = arith.constant 0 : index
    %23 = vector.load %arg2[%c3, %c0_20, %c0_21] : memref<4x16x4xbf16, #tpu.memory_space<vmem>>, vector<1x16x4xbf16>
    %24 = vector.shape_cast %23 : vector<1x16x4xbf16> to vector<16x4xbf16>
    %cst_22 = arith.constant dense<0.000000e+00> : vector<128x4xf32>
    %25 = tpu.matmul %22, %24, %cst_22 {dimension_numbers = #tpu.dot_dimension_numbers<[1], [0], [0], [1], [0, 0, 1, 1], [], []>} : vector<128x16xbf16>, vector<16x4xbf16>, vector<128x4xf32> -> vector<128x4xf32>
    %26 = arith.addf %20, %25 : vector<128x4xf32>
    %27 = vector.shape_cast %26 : vector<128x4xf32> to vector<8x16x4xf32>
    %28 = vector.extract_strided_slice %27 {offsets = [0, 0, 0], sizes = [8, 8, 4], strides = [1, 1, 1]} : vector<8x16x4xf32> to vector<8x8x4xf32>
    %c0_23 = arith.constant 0 : index
    %c0_24 = arith.constant 0 : index
    %c0_25 = arith.constant 0 : index
    %c0_26 = arith.constant 0 : index
    %29 = vector.load %arg4[%c0_23, %c0_24, %c0_25, %c0_26] : memref<1x8x8x4xf32, #tpu.memory_space<vmem>>, vector<1x8x8x4xf32>
    %30 = vector.shape_cast %29 : vector<1x8x8x4xf32> to vector<8x8x4xf32>
    %31 = vector.shape_cast %28 : vector<8x8x4xf32> to vector<1x8x8x4xf32>
    tpu.vector_store %arg4[%c0_23, %c0_24, %c0_25, %c0_26], %31 {strides = array<i32>} : memref<1x8x8x4xf32, #tpu.memory_space<vmem>>, vector<1x8x8x4xf32>,
    return
  }
  func.func @transform_0(%arg0: i32) -> (i32, i32, i32) {
    %c0_i32 = arith.constant 0 : i32
    %c0_i32_0 = arith.constant 0 : i32
    %c0_i32_1 = arith.constant 0 : i32
    return %arg0, %c0_i32, %c0_i32_0 : i32, i32, i32
  }
  func.func @transform_1(%arg0: i32) -> (i32, i32, i32) {
    %c0_i32 = arith.constant 0 : i32
    %c0_i32_0 = arith.constant 0 : i32
    %c0_i32_1 = arith.constant 0 : i32
    %c0_i32_2 = arith.constant 0 : i32
    return %c0_i32, %c0_i32_0, %c0_i32_1 : i32, i32, i32
  }
  func.func @transform_2(%arg0: i32) -> (i32, i32) {
    %c0_i32 = arith.constant 0 : i32
    %c0_i32_0 = arith.constant 0 : i32
    %c0_i32_1 = arith.constant 0 : i32
    return %c0_i32, %c0_i32_0 : i32, i32
  }
  func.func @transform_3(%arg0: i32) -> (i32, i32, i32, i32) {
    %c0_i32 = arith.constant 0 : i32
    %c0_i32_0 = arith.constant 0 : i32
    %c0_i32_1 = arith.constant 0 : i32
    %c0_i32_2 = arith.constant 0 : i32
    return %arg0, %c0_i32, %c0_i32_0, %c0_i32_1 : i32, i32, i32, i32
  }
}

</mosaic_0001>

<llo_original>
// kernel: tpu_custom_call.1
$region0: #{tpu_custom_call.1}
  #allocation0 [shape = 'u32[]', space=smem, size = 0x4, offset = 0x4, fixed_abs, tag = 'smem constant byte address 0x4 - core index']
  #allocation1 [shape = 'u32[72,128]{1,0:T(1,128)}', space=vmem, size = 0x9000, scoped, tag = 'internal scratch']
  %s0 = inlined_call_operand.vmem [shape: bf16[2,160,16], index: 0, kind: input, shape index: {}]
  %s1 = inlined_call_operand.vmem [shape: bf16[4,16,4], index: 1, kind: input, shape index: {}]
  %s2 = inlined_call_operand.vmem [shape: f32[1,4], index: 2, kind: input, shape index: {}]
  %s3 = inlined_call_operand.vmem [shape: f32[2,8,8,4], index: 3, kind: output, shape index: {}]
  %s4 = sld [smem:[#allocation0]]
  $region45: #{tpu_custom_call.1} parent=0
    _
  %s6 = ssub.s32 1, %s4
  %s7 = scalar_select 0, %s6, %s4
  loop: start=0, step=1, limit=4
  $region2: #{tpu_custom_call.1} parent=0 // loop_pre_header
    _
  $region3: #{tpu_custom_call.1} parent=0 // loop_header
    %s9 = sphi 0, %s13
    %p10 = scmp.ge.s32.totalorder %s9, 4
    %s19 = sphi 0, %s21
    %s22 = sphi 0, %s19
    %s23 = sphi 0, %s22
    %s39 = sphi 0, %s23
    %s43 = sphi 0, %s43
    %s45 = sphi 0, %s43
    %s46 = sphi 0, %s45
    %s60 = sphi 0, %s46
    %s64 = sphi 0, %s64
    %s66 = sphi 0, %s64
    %s67 = sphi 0, %s66
    %s81 = sphi 0, %s67
    %s87 = sphi 0, %s89
    %s90 = sphi 0, %s87
    %s91 = sphi 0, %s90
    %s107 = sphi 0, %s91
  $region4: #{tpu_custom_call.1} parent=0 // loop_header_branch
    %12 = sbr.rel (%p10) target = $region8
  $region5: #{tpu_custom_call.1} parent=0 // loop_body
    %s14 = ssub.s32 %s9, 1
    %s15 = ssub.s32 %s9, 2
    %s16 = sadd.s32 %s9, 1
    %s17 = ssub.s32 %s9, %s16
    %p18 = scmp.eq.s32.totalorder %s17, 0
    %s20 = sadd.s32 %s19, 1
    %s21 = scalar_select %p18, %s19, %s20
    %p24 = pneg %p18
    %p25 = scmp.eq.s32.totalorder %s9, 1
    %p26 = por %p24, %p25
    %p27 = scmp.ne.s32.totalorder %s19, %s22
    %p28 = scmp.eq.s32.totalorder %s9, 0
    %p29 = por %p27, %p28
    %p30 = scmp.ne.s32.totalorder %s19, %s22
    %p31 = scmp.eq.s32.totalorder %s14, 1
    %p32 = por %p30, %p31
    %p33 = scmp.ne.s32.totalorder %s22, %s23
    %p34 = scmp.eq.s32.totalorder %s14, 0
    %p35 = por %p33, %p34
    %p36 = scmp.ne.s32.totalorder %s22, %s23
    %p37 = scmp.eq.s32.totalorder %s15, 1
    %p38 = por %p36, %p37
    %p40 = scmp.ne.s32.totalorder %s23, %s39
    %p41 = scmp.eq.s32.totalorder %s15, 0
    %p42 = por %p40, %p41
    %s44 = sadd.s32 %s43, 1
    %p47 = scmp.eq.s32.totalorder %s9, 1
    %p48 = scmp.ne.s32.totalorder %s43, %s45
    %p49 = scmp.eq.s32.totalorder %s9, 0
    %p50 = por %p48, %p49
    %p51 = scmp.ne.s32.totalorder %s43, %s45
    %p52 = scmp.eq.s32.totalorder %s14, 1
    %p53 = por %p51, %p52
    %p54 = scmp.ne.s32.totalorder %s45, %s46
    %p55 = scmp.eq.s32.totalorder %s14, 0
    %p56 = por %p54, %p55
    %p57 = scmp.ne.s32.totalorder %s45, %s46
    %p58 = scmp.eq.s32.totalorder %s15, 1
    %p59 = por %p57, %p58
    %p61 = scmp.ne.s32.totalorder %s46, %s60
    %p62 = scmp.eq.s32.totalorder %s15, 0
    %p63 = por %p61, %p62
    %s65 = sadd.s32 %s64, 1
    %p68 = scmp.eq.s32.totalorder %s9, 1
    %p69 = scmp.ne.s32.totalorder %s64, %s66
    %p70 = scmp.eq.s32.totalorder %s9, 0
    %p71 = por %p69, %p70
    %p72 = scmp.ne.s32.totalorder %s64, %s66
    %p73 = scmp.eq.s32.totalorder %s14, 1
    %p74 = por %p72, %p73
    %p75 = scmp.ne.s32.totalorder %s66, %s67
    %p76 = scmp.eq.s32.totalorder %s14, 0
    %p77 = por %p75, %p76
    %p78 = scmp.ne.s32.totalorder %s66, %s67
    %p79 = scmp.eq.s32.totalorder %s15, 1
    %p80 = por %p78, %p79
    %p82 = scmp.ne.s32.totalorder %s67, %s81
    %p83 = scmp.eq.s32.totalorder %s15, 0
    %p84 = por %p82, %p83
    %s85 = ssub.s32 %s9, %s16
    %p86 = scmp.eq.s32.totalorder %s85, 0
    %s88 = sadd.s32 %s87, 1
    %s89 = scalar_select %p86, %s87, %s88
    %p92 = pneg %p86
    %p93 = scmp.eq.s32.totalorder %s9, 1
    %p94 = por %p92, %p93
    %p95 = scmp.ne.s32.totalorder %s87, %s90
    %p96 = scmp.eq.s32.totalorder %s9, 0
    %p97 = por %p95, %p96
    %p98 = scmp.ne.s32.totalorder %s87, %s90
    %p99 = scmp.eq.s32.totalorder %s14, 1
    %p100 = por %p98, %p99
    %p101 = scmp.ne.s32.totalorder %s90, %s91
    %p102 = scmp.eq.s32.totalorder %s14, 0
    %p103 = por %p101, %p102
    %p104 = scmp.ne.s32.totalorder %s90, %s91
    %p105 = scmp.eq.s32.totalorder %s15, 1
    %p106 = por %p104, %p105
    %p108 = scmp.ne.s32.totalorder %s91, %s107
    %p109 = scmp.eq.s32.totalorder %s15, 0
    %p110 = por %p108, %p109
    %p111 = scmp.le.s32.totalorder 1, %s9
    %p112 = scmp.lt.s32.totalorder %s9, 3
    %p113 = pnand %p111, %p112
    %p114 = pneg %p113
    // Predicated region
    $region9: #{tpu_custom_call.1} parent=5 // pred_check
      _
    $region10: #{tpu_custom_call.1} parent=5 // pred_check_branch
      %116 = sbr.rel (%p113) target = $region12
    $region11: #{tpu_custom_call.1} parent=5 // pred_region
      %s117 = ssub.s32 %s9, 1
      // Predicated region
      $region13: #{tpu_custom_call.1} parent=11 // pred_check
        %p118 = pneg %p56
      $region14: #{tpu_custom_call.1} parent=11 // pred_check_branch
        %120 = sbr.rel (%p118) target = $region16
      $region15: #{tpu_custom_call.1} parent=11 // pred_region
        _
      $region16: #{tpu_custom_call.1} parent=11 // pred_fallthru
        _
      // Predicated region
      $region17: #{tpu_custom_call.1} parent=11 // pred_check
        %p121 = pneg %p77
      $region18: #{tpu_custom_call.1} parent=11 // pred_check_branch
        %123 = sbr.rel (%p121) target = $region20
      $region19: #{tpu_custom_call.1} parent=11 // pred_region
        _
      $region20: #{tpu_custom_call.1} parent=11 // pred_fallthru
        _
    $region12: #{tpu_custom_call.1} parent=5 // pred_fallthru
      _
    %p124 = scmp.lt.s32.totalorder %s9, 2
    // Predicated region
    $region21: #{tpu_custom_call.1} parent=5 // pred_check
      %p125 = pneg %p124
    $region22: #{tpu_custom_call.1} parent=5 // pred_check_branch
      %127 = sbr.rel (%p125) target = $region24
    $region23: #{tpu_custom_call.1} parent=5 // pred_region
      // Predicated region
      $region25: #{tpu_custom_call.1} parent=23 // pred_check
        %p128 = pneg %p29
      $region26: #{tpu_custom_call.1} parent=23 // pred_check_branch
        %130 = sbr.rel (%p128) target = $region28
      $region27: #{tpu_custom_call.1} parent=23 // pred_region
        %p131 = scmp.lt.s32.totalorder %s9, 1
        %s132 = scalar_select %p131, %s9, 1
        %s133 = smul.addr %s132, 20
        %s134 = smul.addr %s133, 4
        %s135 = scalar_lea.vmem %s0, %s134
      $region28: #{tpu_custom_call.1} parent=23 // pred_fallthru
        _
    $region24: #{tpu_custom_call.1} parent=5 // pred_fallthru
      _
    %p136 = scmp.le.s32.totalorder 1, %s9
    %p137 = scmp.lt.s32.totalorder %s9, 3
    %p138 = pnand %p136, %p137
    %p139 = pneg %p138
    // Predicated region
    $region29: #{tpu_custom_call.1} parent=5 // pred_check
      _
    $region30: #{tpu_custom_call.1} parent=5 // pred_check_branch
      %141 = sbr.rel (%p138) target = $region32
    $region31: #{tpu_custom_call.1} parent=5 // pred_region
      %s142 = ssub.s32 %s9, 1
      %p143 = scmp.lt.s32.totalorder %s14, 1
      %s144 = scalar_select %p143, %s14, 1
      %s145 = smul.addr %s144, 20
      %s146 = smul.addr %s145, 4
      %s147 = scalar_lea.vmem %s0, %s146
      %p148 = pneg %p35
      %p149 = pneg %p32
      %p150 = pneg %p56
      %p151 = pneg %p53
      %p152 = pneg %p77
      %p153 = pneg %p74
      %p154 = pneg %p103
      %p155 = pneg %p100
      %p156 = scmp.lt.s32.totalorder %s14, 1
      %s157 = scalar_select %p156, %s14, 1
      %s158 = smul.addr %s157, 8
      %s159 = smul.addr %s158, 8
      %s160 = scalar_lea.vmem %s3, %s159
      %p161 = scmp.lt.s32.totalorder %s14, 1
      %s162 = scalar_select %p161, %s14, 1
      %s163 = smul.addr %s162, 20
      %s164 = smul.addr %s163, 4
      %s165 = scalar_lea.vmem %s0, %s164
      %p166 = scmp.lt.s32.totalorder %s14, 1
      %s167 = scalar_select %p166, %s14, 1
      %s168 = smul.addr %s167, 8
      %s169 = smul.addr %s168, 8
      %s170 = scalar_lea.vmem %s3, %s169
      %v172 = vld [vmem:[%s2] sm:$0x1]
      %v174 = vperm.slane %v172, 0
      %v176 = vld [vmem:[%s165] sm:$0xf]
      %v177 = vld [vmem:[%s165 + $0x4] sm:$0xf]
      %v178 = vld [vmem:[%s165 + $0x8] sm:$0xf]
      %v179 = vld [vmem:[%s165 + $0xc] sm:$0xf]
      %v180 = vld [vmem:[%s165 + $0x10] sm:$0xf]
      %v181 = vld [vmem:[%s165 + $0x14] sm:$0xf]
      %v182 = vld [vmem:[%s165 + $0x18] sm:$0xf]
      %v183 = vld [vmem:[%s165 + $0x1c] sm:$0xf]
      %v184 = vld [vmem:[%s165 + $0x20] sm:$0xf]
      %v185 = vld [vmem:[%s165 + $0x24] sm:$0xf]
      %v186 = vld [vmem:[%s165 + $0x28] sm:$0xf]
      %v187 = vld [vmem:[%s165 + $0x2c] sm:$0xf]
      %v188 = vld [vmem:[%s165 + $0x30] sm:$0xf]
      %v189 = vld [vmem:[%s165 + $0x34] sm:$0xf]
      %v190 = vld [vmem:[%s165 + $0x38] sm:$0xf]
      %v191 = vld [vmem:[%s165 + $0x3c] sm:$0xf]
      %v192 = vld [vmem:[%s1] sm:$0xf]
      %v193 = vld [vmem:[%s1 + $0x4] sm:$0xf]
      %v210 = vunpack.c.l.b16 %v176
      %v211 = vunpack.c.l.b16 %v177
      %v212 = vunpack.c.l.b16 %v178
      %v213 = vunpack.c.l.b16 %v179
      %v214 = vunpack.c.l.b16 %v180
      %v215 = vunpack.c.l.b16 %v181
      %v216 = vunpack.c.l.b16 %v182
      %v217 = vunpack.c.l.b16 %v183
      %v218 = vunpack.c.l.b16 %v184
      %v219 = vunpack.c.l.b16 %v185
      %v220 = vunpack.c.l.b16 %v186
      %v221 = vunpack.c.l.b16 %v187
      %v222 = vunpack.c.l.b16 %v188
      %v223 = vunpack.c.l.b16 %v189
      %v224 = vunpack.c.l.b16 %v190
      %v225 = vunpack.c.l.b16 %v191
      %v226 = vpack.c.b16 %v211, %v210
      %v227 = vpack.c.b16 %v213, %v212
      %v228 = vpack.c.b16 %v215, %v214
      %v229 = vpack.c.b16 %v217, %v216
      %v230 = vpack.c.b16 %v219, %v218
      %v231 = vpack.c.b16 %v221, %v220
      %v232 = vpack.c.b16 %v223, %v222
      %v233 = vpack.c.b16 %v225, %v224
      %v236 = vunpack.c.l.b16 %v192
      %v237 = vunpack.c.l.b16 %v193
      %v238 = vpack.c.b16 %v237, %v236
      %vm240 = vcmask 130048
      %v242 = vsel %vm240, %v226, 0
      %v245 = vsel %vm240, %v227, 0
      %v248 = vsel %vm240, %v228, 0
      %v251 = vsel %vm240, %v229, 0
      %v254 = vsel %vm240, %v230, 0
      %v257 = vsel %vm240, %v231, 0
      %v260 = vsel %vm240, %v232, 0
      %v263 = vsel %vm240, %v233, 0
      %265 = vmatpush.bf16.msra.mxu0 0
      %266 = vmatpush.bf16.msra.mxu0 0
      %267 = vmatpush.bf16.msra.mxu0 0
      %268 = vmatpush.bf16.msra.mxu0 0
      %269 = vmatpush.bf16.msra.mxu0 0
      %270 = vmatpush.bf16.msra.mxu0 0
      %271 = vmatpush.bf16.msra.mxu0 0
      %272 = vmatpush.bf16.msra.mxu0 %v238
      %273 = vmatmul.bf16.gmra.mxu0 %v242
      %v274 = vpop.f32.mrf.mxu0
      %v275 = vadd.f32 0.0, %v274
      %v276 = vpop.f32.mrf.mxu0
      %277 = vmatmul.bf16.gmra.mxu0 %v245
      %v278 = vpop.f32.mrf.mxu0
      %v279 = vadd.f32 0.0, %v278
      %v280 = vpop.f32.mrf.mxu0
      %281 = vmatmul.bf16.gmra.mxu0 %v248
      %v282 = vpop.f32.mrf.mxu0
      %v283 = vadd.f32 0.0, %v282
      %v284 = vpop.f32.mrf.mxu0
      %285 = vmatmul.bf16.gmra.mxu0 %v251
      %v286 = vpop.f32.mrf.mxu0
      %v287 = vadd.f32 0.0, %v286
      %v288 = vpop.f32.mrf.mxu0
      %289 = vmatmul.bf16.gmra.mxu0 %v254
      %v290 = vpop.f32.mrf.mxu0
      %v291 = vadd.f32 0.0, %v290
      %v292 = vpop.f32.mrf.mxu0
      %293 = vmatmul.bf16.gmra.mxu0 %v257
      %v294 = vpop.f32.mrf.mxu0
      %v295 = vadd.f32 0.0, %v294
      %v296 = vpop.f32.mrf.mxu0
      %297 = vmatmul.bf16.gmra.mxu0 %v260
      %v298 = vpop.f32.mrf.mxu0
      %v299 = vadd.f32 0.0, %v298
      %v300 = vpop.f32.mrf.mxu0
      %301 = vmatmul.bf16.gmra.mxu0 %v263
      %v302 = vpop.f32.mrf.mxu0
      %v303 = vadd.f32 0.0, %v302
      %v304 = vpop.f32.mrf.mxu0
      %305 = vdwg.mxu0
      %v306 = vadd.f32 %v174, %v275
      %v307 = vadd.f32 %v174, %v279
      %v308 = vadd.f32 %v174, %v283
      %v309 = vadd.f32 %v174, %v287
      %v310 = vadd.f32 %v174, %v291
      %v311 = vadd.f32 %v174, %v295
      %v312 = vadd.f32 %v174, %v299
      %v313 = vadd.f32 %v174, %v303
      %v314 = vld [vmem:[%s165] sm:$0xf]
      %v315 = vld [vmem:[%s165 + $0x4] sm:$0xf]
      %v316 = vld [vmem:[%s165 + $0x8] sm:$0xf]
      %v317 = vld [vmem:[%s165 + $0xc] sm:$0xf]
      %v318 = vld [vmem:[%s165 + $0x10] sm:$0xf]
      %v319 = vld [vmem:[%s165 + $0x14] sm:$0xf]
      %v320 = vld [vmem:[%s165 + $0x18] sm:$0xf]
      %v321 = vld [vmem:[%s165 + $0x1c] sm:$0xf]
      %v322 = vld [vmem:[%s165 + $0x20] sm:$0xf]
      %v323 = vld [vmem:[%s165 + $0x24] sm:$0xf]
      %v324 = vld [vmem:[%s165 + $0x28] sm:$0xf]
      %v325 = vld [vmem:[%s165 + $0x2c] sm:$0xf]
      %v326 = vld [vmem:[%s165 + $0x30] sm:$0xf]
      %v327 = vld [vmem:[%s165 + $0x34] sm:$0xf]
      %v328 = vld [vmem:[%s165 + $0x38] sm:$0xf]
      %v329 = vld [vmem:[%s165 + $0x3c] sm:$0xf]
      %v330 = vld [vmem:[%s165 + $0x40] sm:$0x1]
      %s331 = scalar_lea.vmem %s1, 8
      %v332 = vld [vmem:[%s331] sm:$0xf]
      %v333 = vld [vmem:[%s331 + $0x4] sm:$0xf]
      %v351 = vunpack.c.l.b16 %v314
      %v352 = vunpack.c.l.b16 %v315
      %v353 = vunpack.c.l.b16 %v316
      %v354 = vunpack.c.l.b16 %v317
      %v355 = vunpack.c.l.b16 %v318
      %v356 = vunpack.c.l.b16 %v319
      %v357 = vunpack.c.l.b16 %v320
      %v358 = vunpack.c.l.b16 %v321
      %v359 = vunpack.c.l.b16 %v322
      %v360 = vunpack.c.l.b16 %v323
      %v361 = vunpack.c.l.b16 %v324
      %v362 = vunpack.c.l.b16 %v325
      %v363 = vunpack.c.l.b16 %v326
      %v364 = vunpack.c.l.b16 %v327
      %v365 = vunpack.c.l.b16 %v328
      %v366 = vunpack.c.l.b16 %v329
      %v367 = vunpack.c.l.b16 %v330
      %v368 = vpack.c.b16 %v352, %v351
      %v369 = vpack.c.b16 %v354, %v353
      %v370 = vpack.c.b16 %v356, %v355
      %v371 = vpack.c.b16 %v358, %v357
      %v372 = vpack.c.b16 %v360, %v359
      %v373 = vpack.c.b16 %v362, %v361
      %v374 = vpack.c.b16 %v364, %v363
      %v375 = vpack.c.b16 %v366, %v365
      %v376 = vpack.c.b16 %v367, %v367
      %vm377 = vsmask.f32 7424
      %v379 = vshrl.u32 %v368, 16
      %v381 = vshll.u32 %v368, 16
      %v383 = vrot.slane %v381, 1
      %v384 = vor.u32 %v379, %v383
      %v386 = vshll.u32 %v369, 16
      %v388 = vrot.slane %v386, 1
      %v389 = vsel %vm377, %v384, %v388
      %v390 = vshrl.u32 %v369, 16
      %v392 = vor.u32 %v390, %v388
      %v394 = vshll.u32 %v370, 16
      %v396 = vrot.slane %v394, 1
      %v397 = vsel %vm377, %v392, %v396
      %v398 = vshrl.u32 %v370, 16
      %v400 = vor.u32 %v398, %v396
      %v402 = vshll.u32 %v371, 16
      %v404 = vrot.slane %v402, 1
      %v405 = vsel %vm377, %v400, %v404
      %v406 = vshrl.u32 %v371, 16
      %v408 = vor.u32 %v406, %v404
      %v410 = vshll.u32 %v372, 16
      %v412 = vrot.slane %v410, 1
      %v413 = vsel %vm377, %v408, %v412
      %v414 = vshrl.u32 %v372, 16
      %v416 = vor.u32 %v414, %v412
      %v418 = vshll.u32 %v373, 16
      %v420 = vrot.slane %v418, 1
      %v421 = vsel %vm377, %v416, %v420
      %v422 = vshrl.u32 %v373, 16
      %v424 = vor.u32 %v422, %v420
      %v426 = vshll.u32 %v374, 16
      %v428 = vrot.slane %v426, 1
      %v429 = vsel %vm377, %v424, %v428
      %v430 = vshrl.u32 %v374, 16
      %v432 = vor.u32 %v430, %v428
      %v434 = vshll.u32 %v375, 16
      %v436 = vrot.slane %v434, 1
      %v437 = vsel %vm377, %v432, %v436
      %v438 = vshrl.u32 %v375, 16
      %v440 = vor.u32 %v438, %v436
      %v442 = vshll.u32 %v376, 16
      %v444 = vrot.slane %v442, 1
      %v445 = vsel %vm377, %v440, %v444
      %v448 = vunpack.c.l.b16 %v332
      %v449 = vunpack.c.l.b16 %v333
      %v450 = vpack.c.b16 %v449, %v448
      %v453 = vsel %vm240, %v389, 0
      %v456 = vsel %vm240, %v397, 0
      %v459 = vsel %vm240, %v405, 0
      %v462 = vsel %vm240, %v413, 0
      %v465 = vsel %vm240, %v421, 0
      %v468 = vsel %vm240, %v429, 0
      %v471 = vsel %vm240, %v437, 0
      %v474 = vsel %vm240, %v445, 0
      %476 = vmatpush.bf16.msra.mxu0 0
      %477 = vmatpush.bf16.msra.mxu0 0
      %478 = vmatpush.bf16.msra.mxu0 0
      %479 = vmatpush.bf16.msra.mxu0 0
      %480 = vmatpush.bf16.msra.mxu0 0
      %481 = vmatpush.bf16.msra.mxu0 0
      %482 = vmatpush.bf16.msra.mxu0 0
      %483 = vmatpush.bf16.msra.mxu0 %v450
      %484 = vmatmul.bf16.gmra.mxu0 %v453
      %v485 = vpop.f32.mrf.mxu0
      %v486 = vadd.f32 0.0, %v485
      %v487 = vpop.f32.mrf.mxu0
      %488 = vmatmul.bf16.gmra.mxu0 %v456
      %v489 = vpop.f32.mrf.mxu0
      %v490 = vadd.f32 0.0, %v489
      %v491 = vpop.f32.mrf.mxu0
      %492 = vmatmul.bf16.gmra.mxu0 %v459
      %v493 = vpop.f32.mrf.mxu0
      %v494 = vadd.f32 0.0, %v493
      %v495 = vpop.f32.mrf.mxu0
      %496 = vmatmul.bf16.gmra.mxu0 %v462
      %v497 = vpop.f32.mrf.mxu0
      %v498 = vadd.f32 0.0, %v497
      %v499 = vpop.f32.mrf.mxu0
      %500 = vmatmul.bf16.gmra.mxu0 %v465
      %v501 = vpop.f32.mrf.mxu0
      %v502 = vadd.f32 0.0, %v501
      %v503 = vpop.f32.mrf.mxu0
      %504 = vmatmul.bf16.gmra.mxu0 %v468
      %v505 = vpop.f32.mrf.mxu0
      %v506 = vadd.f32 0.0, %v505
      %v507 = vpop.f32.mrf.mxu0
      %508 = vmatmul.bf16.gmra.mxu0 %v471
      %v509 = vpop.f32.mrf.mxu0
      %v510 = vadd.f32 0.0, %v509
      %v511 = vpop.f32.mrf.mxu0
      %512 = vmatmul.bf16.gmra.mxu0 %v474
      %v513 = vpop.f32.mrf.mxu0
      %v514 = vadd.f32 0.0, %v513
      %v515 = vpop.f32.mrf.mxu0
      %516 = vdwg.mxu0
      %v517 = vadd.f32 %v306, %v486
      %v518 = vadd.f32 %v307, %v490
      %v519 = vadd.f32 %v308, %v494
      %v520 = vadd.f32 %v309, %v498
      %v521 = vadd.f32 %v310, %v502
      %v522 = vadd.f32 %v311, %v506
      %v523 = vadd.f32 %v312, %v510
      %v524 = vadd.f32 %v313, %v514
      %v525 = vld [vmem:[%s165 + $0x8] sm:$0xf]
      %v526 = vld [vmem:[%s165 + $0xc] sm:$0xf]
      %v527 = vld [vmem:[%s165 + $0x10] sm:$0xf]
      %v528 = vld [vmem:[%s165 + $0x14] sm:$0xf]
      %v529 = vld [vmem:[%s165 + $0x18] sm:$0xf]
      %v530 = vld [vmem:[%s165 + $0x1c] sm:$0xf]
      %v531 = vld [vmem:[%s165 + $0x20] sm:$0xf]
      %v532 = vld [vmem:[%s165 + $0x24] sm:$0xf]
      %v533 = vld [vmem:[%s165 + $0x28] sm:$0xf]
      %v534 = vld [vmem:[%s165 + $0x2c] sm:$0xf]
      %v535 = vld [vmem:[%s165 + $0x30] sm:$0xf]
      %v536 = vld [vmem:[%s165 + $0x34] sm:$0xf]
      %v537 = vld [vmem:[%s165 + $0x38] sm:$0xf]
      %v538 = vld [vmem:[%s165 + $0x3c] sm:$0xf]
      %v539 = vld [vmem:[%s165 + $0x40] sm:$0xf]
      %v540 = vld [vmem:[%s165 + $0x44] sm:$0xf]
      %s541 = scalar_lea.vmem %s1, 16
      %v542 = vld [vmem:[%s541] sm:$0xf]
      %v543 = vld [vmem:[%s541 + $0x4] sm:$0xf]
      %v560 = vunpack.c.l.b16 %v525
      %v561 = vunpack.c.l.b16 %v526
      %v562 = vunpack.c.l.b16 %v527
      %v563 = vunpack.c.l.b16 %v528
      %v564 = vunpack.c.l.b16 %v529
      %v565 = vunpack.c.l.b16 %v530
      %v566 = vunpack.c.l.b16 %v531
      %v567 = vunpack.c.l.b16 %v532
      %v568 = vunpack.c.l.b16 %v533
      %v569 = vunpack.c.l.b16 %v534
      %v570 = vunpack.c.l.b16 %v535
      %v571 = vunpack.c.l.b16 %v536
      %v572 = vunpack.c.l.b16 %v537
      %v573 = vunpack.c.l.b16 %v538
      %v574 = vunpack.c.l.b16 %v539
      %v575 = vunpack.c.l.b16 %v540
      %v576 = vpack.c.b16 %v561, %v560
      %v577 = vpack.c.b16 %v563, %v562
      %v578 = vpack.c.b16 %v565, %v564
      %v579 = vpack.c.b16 %v567, %v566
      %v580 = vpack.c.b16 %v569, %v568
      %v581 = vpack.c.b16 %v571, %v570
      %v582 = vpack.c.b16 %v573, %v572
      %v583 = vpack.c.b16 %v575, %v574
      %v586 = vunpack.c.l.b16 %v542
      %v587 = vunpack.c.l.b16 %v543
      %v588 = vpack.c.b16 %v587, %v586
      %v591 = vsel %vm240, %v576, 0
      %v594 = vsel %vm240, %v577, 0
      %v597 = vsel %vm240, %v578, 0
      %v600 = vsel %vm240, %v579, 0
      %v603 = vsel %vm240, %v580, 0
      %v606 = vsel %vm240, %v581, 0
      %v609 = vsel %vm240, %v582, 0
      %v612 = vsel %vm240, %v583, 0
      %614 = vmatpush.bf16.msra.mxu0 0
      %615 = vmatpush.bf16.msra.mxu0 0
      %616 = vmatpush.bf16.msra.mxu0 0
      %617 = vmatpush.bf16.msra.mxu0 0
      %618 = vmatpush.bf16.msra.mxu0 0
      %619 = vmatpush.bf16.msra.mxu0 0
      %620 = vmatpush.bf16.msra.mxu0 0
      %621 = vmatpush.bf16.msra.mxu0 %v588
      %622 = vmatmul.bf16.gmra.mxu0 %v591
      %v623 = vpop.f32.mrf.mxu0
      %v624 = vadd.f32 0.0, %v623
      %v625 = vpop.f32.mrf.mxu0
      %626 = vmatmul.bf16.gmra.mxu0 %v594
      %v627 = vpop.f32.mrf.mxu0
      %v628 = vadd.f32 0.0, %v627
      %v629 = vpop.f32.mrf.mxu0
      %630 = vmatmul.bf16.gmra.mxu0 %v597
      %v631 = vpop.f32.mrf.mxu0
      %v632 = vadd.f32 0.0, %v631
      %v633 = vpop.f32.mrf.mxu0
      %634 = vmatmul.bf16.gmra.mxu0 %v600
      %v635 = vpop.f32.mrf.mxu0
      %v636 = vadd.f32 0.0, %v635
      %v637 = vpop.f32.mrf.mxu0
      %638 = vmatmul.bf16.gmra.mxu0 %v603
      %v639 = vpop.f32.mrf.mxu0
      %v640 = vadd.f32 0.0, %v639
      %v641 = vpop.f32.mrf.mxu0
      %642 = vmatmul.bf16.gmra.mxu0 %v606
      %v643 = vpop.f32.mrf.mxu0
      %v644 = vadd.f32 0.0, %v643
      %v645 = vpop.f32.mrf.mxu0
      %646 = vmatmul.bf16.gmra.mxu0 %v609
      %v647 = vpop.f32.mrf.mxu0
      %v648 = vadd.f32 0.0, %v647
      %v649 = vpop.f32.mrf.mxu0
      %650 = vmatmul.bf16.gmra.mxu0 %v612
      %v651 = vpop.f32.mrf.mxu0
      %v652 = vadd.f32 0.0, %v651
      %v653 = vpop.f32.mrf.mxu0
      %654 = vdwg.mxu0
      %v655 = vadd.f32 %v517, %v624
      %v656 = vadd.f32 %v518, %v628
      %v657 = vadd.f32 %v519, %v632
      %v658 = vadd.f32 %v520, %v636
      %v659 = vadd.f32 %v521, %v640
      %v660 = vadd.f32 %v522, %v644
      %v661 = vadd.f32 %v523, %v648
      %v662 = vadd.f32 %v524, %v652
      %v663 = vld [vmem:[%s165 + $0x8] sm:$0xf]
      %v664 = vld [vmem:[%s165 + $0xc] sm:$0xf]
      %v665 = vld [vmem:[%s165 + $0x10] sm:$0xf]
      %v666 = vld [vmem:[%s165 + $0x14] sm:$0xf]
      %v667 = vld [vmem:[%s165 + $0x18] sm:$0xf]
      %v668 = vld [vmem:[%s165 + $0x1c] sm:$0xf]
      %v669 = vld [vmem:[%s165 + $0x20] sm:$0xf]
      %v670 = vld [vmem:[%s165 + $0x24] sm:$0xf]
      %v671 = vld [vmem:[%s165 + $0x28] sm:$0xf]
      %v672 = vld [vmem:[%s165 + $0x2c] sm:$0xf]
      %v673 = vld [vmem:[%s165 + $0x30] sm:$0xf]
      %v674 = vld [vmem:[%s165 + $0x34] sm:$0xf]
      %v675 = vld [vmem:[%s165 + $0x38] sm:$0xf]
      %v676 = vld [vmem:[%s165 + $0x3c] sm:$0xf]
      %v677 = vld [vmem:[%s165 + $0x40] sm:$0xf]
      %v678 = vld [vmem:[%s165 + $0x44] sm:$0xf]
      %v679 = vld [vmem:[%s165 + $0x48] sm:$0x1]
      %s680 = scalar_lea.vmem %s1, 24
      %v681 = vld [vmem:[%s680] sm:$0xf]
      %v682 = vld [vmem:[%s680 + $0x4] sm:$0xf]
      %v700 = vunpack.c.l.b16 %v663
      %v701 = vunpack.c.l.b16 %v664
      %v702 = vunpack.c.l.b16 %v665
      %v703 = vunpack.c.l.b16 %v666
      %v704 = vunpack.c.l.b16 %v667
      %v705 = vunpack.c.l.b16 %v668
      %v706 = vunpack.c.l.b16 %v669
      %v707 = vunpack.c.l.b16 %v670
      %v708 = vunpack.c.l.b16 %v671
      %v709 = vunpack.c.l.b16 %v672
      %v710 = vunpack.c.l.b16 %v673
      %v711 = vunpack.c.l.b16 %v674
      %v712 = vunpack.c.l.b16 %v675
      %v713 = vunpack.c.l.b16 %v676
      %v714 = vunpack.c.l.b16 %v677
      %v715 = vunpack.c.l.b16 %v678
      %v716 = vunpack.c.l.b16 %v679
      %v717 = vpack.c.b16 %v701, %v700
      %v718 = vpack.c.b16 %v703, %v702
      %v719 = vpack.c.b16 %v705, %v704
      %v720 = vpack.c.b16 %v707, %v706
      %v721 = vpack.c.b16 %v709, %v708
      %v722 = vpack.c.b16 %v711, %v710
      %v723 = vpack.c.b16 %v713, %v712
      %v724 = vpack.c.b16 %v715, %v714
      %v725 = vpack.c.b16 %v716, %v716
      %v727 = vshrl.u32 %v717, 16
      %v729 = vshll.u32 %v717, 16
      %v731 = vrot.slane %v729, 1
      %v732 = vor.u32 %v727, %v731
      %v734 = vshll.u32 %v718, 16
      %v736 = vrot.slane %v734, 1
      %v737 = vsel %vm377, %v732, %v736
      %v738 = vshrl.u32 %v718, 16
      %v740 = vor.u32 %v738, %v736
      %v742 = vshll.u32 %v719, 16
      %v744 = vrot.slane %v742, 1
      %v745 = vsel %vm377, %v740, %v744
      %v746 = vshrl.u32 %v719, 16
      %v748 = vor.u32 %v746, %v744
      %v750 = vshll.u32 %v720, 16
      %v752 = vrot.slane %v750, 1
      %v753 = vsel %vm377, %v748, %v752
      %v754 = vshrl.u32 %v720, 16
      %v756 = vor.u32 %v754, %v752
      %v758 = vshll.u32 %v721, 16
      %v760 = vrot.slane %v758, 1
      %v761 = vsel %vm377, %v756, %v760
      %v762 = vshrl.u32 %v721, 16
      %v764 = vor.u32 %v762, %v760
      %v766 = vshll.u32 %v722, 16
      %v768 = vrot.slane %v766, 1
      %v769 = vsel %vm377, %v764, %v768
      %v770 = vshrl.u32 %v722, 16
      %v772 = vor.u32 %v770, %v768
      %v774 = vshll.u32 %v723, 16
      %v776 = vrot.slane %v774, 1
      %v777 = vsel %vm377, %v772, %v776
      %v778 = vshrl.u32 %v723, 16
      %v780 = vor.u32 %v778, %v776
      %v782 = vshll.u32 %v724, 16
      %v784 = vrot.slane %v782, 1
      %v785 = vsel %vm377, %v780, %v784
      %v786 = vshrl.u32 %v724, 16
      %v788 = vor.u32 %v786, %v784
      %v790 = vshll.u32 %v725, 16
      %v792 = vrot.slane %v790, 1
      %v793 = vsel %vm377, %v788, %v792
      %v796 = vunpack.c.l.b16 %v681
      %v797 = vunpack.c.l.b16 %v682
      %v798 = vpack.c.b16 %v797, %v796
      %v801 = vsel %vm240, %v737, 0
      %v804 = vsel %vm240, %v745, 0
      %v807 = vsel %vm240, %v753, 0
      %v810 = vsel %vm240, %v761, 0
      %v813 = vsel %vm240, %v769, 0
      %v816 = vsel %vm240, %v777, 0
      %v819 = vsel %vm240, %v785, 0
      %v822 = vsel %vm240, %v793, 0
      %824 = vmatpush.bf16.msra.mxu0 0
      %825 = vmatpush.bf16.msra.mxu0 0
      %826 = vmatpush.bf16.msra.mxu0 0
      %827 = vmatpush.bf16.msra.mxu0 0
      %828 = vmatpush.bf16.msra.mxu0 0
      %829 = vmatpush.bf16.msra.mxu0 0
      %830 = vmatpush.bf16.msra.mxu0 0
      %831 = vmatpush.bf16.msra.mxu0 %v798
      %832 = vmatmul.bf16.gmra.mxu0 %v801
      %v833 = vpop.f32.mrf.mxu0
      %v834 = vadd.f32 0.0, %v833
      %v835 = vpop.f32.mrf.mxu0
      %836 = vmatmul.bf16.gmra.mxu0 %v804
      %v837 = vpop.f32.mrf.mxu0
      %v838 = vadd.f32 0.0, %v837
      %v839 = vpop.f32.mrf.mxu0
      %840 = vmatmul.bf16.gmra.mxu0 %v807
      %v841 = vpop.f32.mrf.mxu0
      %v842 = vadd.f32 0.0, %v841
      %v843 = vpop.f32.mrf.mxu0
      %844 = vmatmul.bf16.gmra.mxu0 %v810
      %v845 = vpop.f32.mrf.mxu0
      %v846 = vadd.f32 0.0, %v845
      %v847 = vpop.f32.mrf.mxu0
      %848 = vmatmul.bf16.gmra.mxu0 %v813
      %v849 = vpop.f32.mrf.mxu0
      %v850 = vadd.f32 0.0, %v849
      %v851 = vpop.f32.mrf.mxu0
      %852 = vmatmul.bf16.gmra.mxu0 %v816
      %v853 = vpop.f32.mrf.mxu0
      %v854 = vadd.f32 0.0, %v853
      %v855 = vpop.f32.mrf.mxu0
      %856 = vmatmul.bf16.gmra.mxu0 %v819
      %v857 = vpop.f32.mrf.mxu0
      %v858 = vadd.f32 0.0, %v857
      %v859 = vpop.f32.mrf.mxu0
      %860 = vmatmul.bf16.gmra.mxu0 %v822
      %v861 = vpop.f32.mrf.mxu0
      %v862 = vadd.f32 0.0, %v861
      %v863 = vpop.f32.mrf.mxu0
      %864 = vdwg.mxu0
      %v865 = vadd.f32 %v655, %v834
      %v866 = vadd.f32 %v656, %v838
      %v867 = vadd.f32 %v657, %v842
      %v868 = vadd.f32 %v658, %v846
      %v869 = vadd.f32 %v659, %v850
      %v870 = vadd.f32 %v660, %v854
      %v871 = vadd.f32 %v661, %v858
      %v872 = vadd.f32 %v662, %v862
      %vm873 = vcmask 31744
      %874 = vst.msk [vmem:[%s170] sm:$0xff] %vm873, %v865
      %875 = vst.msk [vmem:[%s170 + $0x8] sm:$0xff] %vm873, %v866
      %876 = vst.msk [vmem:[%s170 + $0x10] sm:$0xff] %vm873, %v867
      %877 = vst.msk [vmem:[%s170 + $0x18] sm:$0xff] %vm873, %v868
      %878 = vst.msk [vmem:[%s170 + $0x20] sm:$0xff] %vm873, %v869
      %879 = vst.msk [vmem:[%s170 + $0x28] sm:$0xff] %vm873, %v870
      %880 = vst.msk [vmem:[%s170 + $0x30] sm:$0xff] %vm873, %v871
      %881 = vst.msk [vmem:[%s170 + $0x38] sm:$0xff] %vm873, %v872
      %p882 = scmp.lt.s32.totalorder %s14, 1
      %s883 = scalar_select %p882, %s14, 1
      %s884 = smul.addr %s883, 8
      %s885 = smul.addr %s884, 8
      %s886 = scalar_lea.vmem %s3, %s885
      // Predicated region
      $region33: #{tpu_custom_call.1} parent=31 // pred_check
        %p887 = pneg %p100
      $region34: #{tpu_custom_call.1} parent=31 // pred_check_branch
        %889 = sbr.rel (%p887) target = $region36
      $region35: #{tpu_custom_call.1} parent=31 // pred_region
        _
      $region36: #{tpu_custom_call.1} parent=31 // pred_fallthru
        _
    $region32: #{tpu_custom_call.1} parent=5 // pred_fallthru
      _
    %p890 = scmp.le.s32.totalorder 2, %s9
    // Predicated region
    $region37: #{tpu_custom_call.1} parent=5 // pred_check
      %p891 = pneg %p890
    $region38: #{tpu_custom_call.1} parent=5 // pred_check_branch
      %893 = sbr.rel (%p891) target = $region40
    $region39: #{tpu_custom_call.1} parent=5 // pred_region
      %s894 = ssub.s32 %s9, 2
      // Predicated region
      $region41: #{tpu_custom_call.1} parent=39 // pred_check
        %p895 = pneg %p106
      $region42: #{tpu_custom_call.1} parent=39 // pred_check_branch
        %897 = sbr.rel (%p895) target = $region44
      $region43: #{tpu_custom_call.1} parent=39 // pred_region
        %p898 = scmp.lt.s32.totalorder %s15, 1
        %s899 = scalar_select %p898, %s15, 1
        %s900 = smul.addr %s899, 8
        %s901 = smul.addr %s900, 8
        %s902 = scalar_lea.vmem %s3, %s901
      $region44: #{tpu_custom_call.1} parent=39 // pred_fallthru
        _
    $region40: #{tpu_custom_call.1} parent=5 // pred_fallthru
      _
  $region6: #{tpu_custom_call.1} parent=0 // loop_footer
    %s13 = sadd.s32 1, %s9
  $region7: #{tpu_custom_call.1} parent=0 // loop_footer_branch
    %8 = sbr.rel target = $region3
  $region8: #{tpu_custom_call.1} parent=0 // loop_exit
    _

</llo_original>
